<compile_context>
chip_gen: v7x
topology: tpu7x:2x2x1
jax: 0.10.0
libtpu: 0.0.40
codegen_flags: <defaults>
</compile_context>

<pallas_src>
import functools
import numpy as np

import jax
import jax.numpy as jnp
from jax.experimental import pallas as pl
from jax.experimental.pallas import tpu as pltpu


def _cdiv(a, b):
    return (a + b - 1) // b


def _vmem_limit_bytes():
    # ~3/4 of physical VMEM: ~96 MiB on v5e/v6e (128 MiB), ~48 MiB on v7x (64 MiB).
    cap = 64 << 20
    try:
        info = pltpu.get_tpu_info()
        for name in ("vmem_capacity_bytes", "vmem_size_bytes", "vmem_bytes"):
            v = getattr(info, name, None)
            if v:
                cap = int(v)
                break
    except Exception:
        pass
    return max(32 << 20, min(96 << 20, (cap * 3) // 4))


# ---------------------------------------------------------------------------
# Phase 1: per-core tiled reduction. Each core accumulates sum(x) / sum(x*x)
# for its half of the row tiles directly into its (1, 8, L) output block
# (resident across the inner 'arbitrary' axis). Ragged / duplicated tiles are
# masked with an iota row mask; no host padding anywhere.
# ---------------------------------------------------------------------------
def _bn_reduce_kernel(x_ref, psum_ref, psq_ref, *,
                      rows, tm, sub, tiles_per_core, needs_mask):
    p = pl.program_id(0)
    t = pl.program_id(1)

    @pl.when(t == 0)
    def _():
        psum_ref[...] = jnp.zeros_like(psum_ref)
        psq_ref[...] = jnp.zeros_like(psq_ref)

    x = x_ref[...].astype(jnp.float32)                       # (tm, L)

    if needs_mask:
        # zero rows past the end of the array (partial last tile) and the whole tile
        # when a core re-reads the clamped last block (odd tile count split).
        g = p * tiles_per_core + t                           # logical (unclamped) tile id
        valid = rows - g * tm
        row_id = jax.lax.broadcasted_iota(jnp.int32, x.shape, 0)
        x = jnp.where(row_id < valid, x, 0.0)

    if sub == 8:
        # fold sublane-groups with pure VPU adds; the final 8->1 collapse happens once
        # in the epilogue, not per tile.
        ps = jnp.sum(x.reshape(tm // 8, 8, -1), axis=0)      # (8, L)
        pq = jnp.sum((x * x).reshape(tm // 8, 8, -1), axis=0)
    else:
        ps = jnp.sum(x, axis=0, keepdims=True)               # (1, L) (tiny single-tile case)
        pq = jnp.sum(x * x, axis=0, keepdims=True)

    psum_ref[...] += ps[None]
    psq_ref[...] += pq[None]


# ---------------------------------------------------------------------------
# Phase 2: tiled, lane-dense normalize.  y = x * scale + shift  (2 VPU ops/elem)
# ---------------------------------------------------------------------------
def _bn_normalize_kernel(x_ref, scale_ref, shift_ref, o_ref):
    y = x_ref[...].astype(jnp.float32) * scale_ref[...] + shift_ref[...]
    o_ref[...] = y.astype(o_ref.dtype)


def batchnorm_forward(x, gamma, beta, running_mean=None, running_var=None, *,
                      momentum=0.1, eps=1e-5, training=True, block_bytes=4 << 20):
    """Channels-last BatchNorm. Returns (out, new_running_mean, new_running_var)."""
    orig_shape = x.shape
    C = int(orig_shape[-1])
    M = 1
    for d in orig_shape[:-1]:
        M *= int(d)
    M = max(M, 1)

    # ---- lane-dense relayout: pack `rep` consecutive rows into one 128-wide row ----
    if C % 128 != 0 and 128 % C == 0 and M % (128 // C) == 0:
        rep = 128 // C
    else:
        rep = 1
        # TODO(synk): for C that is neither a multiple nor a divisor of 128 (or when
        # M % rep != 0) stores are lane-sparse; a channel-pad-to-128 path would make
        # them lane-dense at the cost of one extra pass over the output.
    L = rep * C
    rows = (M * C) // L                      # rows in the lane-dense view
    xl = x.reshape(rows, L)                  # metadata-only reshape (contiguous)

    # ---- byte-budget-driven row tile (multiple of 8); ragged tail masked in-kernel --
    tm = max(8, (int(block_bytes) // (4 * L) // 8) * 8)
    if tm >= rows:
        tm = rows                            # one full block (always layout-legal)
    num_tiles = _cdiv(rows, tm)
    sub = 8 if tm % 8 == 0 else 1

    # ---- phase 1: per-core partial sums / sums of squares ---------------------------
    n_cores = 2 if num_tiles >= 2 else 1     # v7x megacore split; harmless on 1-TC chips
    tiles_per_core = _cdiv(num_tiles, n_cores)
    needs_mask = (rows % tm != 0) or (tiles_per_core * n_cores != num_tiles)

    def x_map_reduce(p, t):
        # clamp so the block start always stays in range; duplicated clamped tiles are
        # fully masked in the kernel.
        return (jnp.minimum(p * tiles_per_core + t, num_tiles - 1), 0)

    reduce_kernel = functools.partial(
        _bn_reduce_kernel, rows=rows, tm=tm, sub=sub,
        tiles_per_core=tiles_per_core, needs_mask=needs_mask)

    part_spec = pl.BlockSpec((1, sub, L), lambda p, t: (p, 0, 0))
    vmem_limit = _vmem_limit_bytes()

    psum, psq = pl.pallas_call(
        reduce_kernel,
        out_shape=(jax.ShapeDtypeStruct((n_cores, sub, L), jnp.float32),
                   jax.ShapeDtypeStruct((n_cores, sub, L), jnp.float32)),
        grid=(n_cores, tiles_per_core),
        in_specs=[pl.BlockSpec((tm, L), x_map_reduce)],
        out_specs=(part_spec, part_spec),
        compiler_params=pltpu.CompilerParams(
            dimension_semantics=("parallel", "arbitrary"),
            vmem_limit_bytes=vmem_limit),
    )(xl)

    # ---- tiny (C,)-sized epilogue: stats, running update, folded affine -------------
    gamma_f = gamma.reshape(C).astype(jnp.float32)
    beta_f = beta.reshape(C).astype(jnp.float32)
    s = jnp.sum(psum, axis=(0, 1))                           # (L,)
    q = jnp.sum(psq, axis=(0, 1))
    if rep > 1:
        s = jnp.sum(s.reshape(rep, C), axis=0)               # fold lane-replicated groups
        q = jnp.sum(q.reshape(rep, C), axis=0)
    inv_m = 1.0 / float(M)
    mean = s * inv_m
    var = jnp.maximum(q * inv_m - mean * mean, 0.0)          # population var (correction=0)

    track = (running_mean is not None) and (running_var is not None)
    if training and track:
        # module semantics: update running stats, then normalize with the UPDATED stats
        rm = running_mean.reshape(C).astype(jnp.float32)
        rv = running_var.reshape(C).astype(jnp.float32)
        new_rm = (1.0 - momentum) * rm + momentum * mean
        new_rv = (1.0 - momentum) * rv + momentum * var
        use_mean, use_var = new_rm, new_rv
    else:
        use_mean, use_var = mean, var
        new_rm, new_rv = running_mean, running_var

    scale_c = gamma_f * jax.lax.rsqrt(use_var + eps)
    shift_c = beta_f - use_mean * scale_c
    scale_l = jnp.tile(scale_c, rep).reshape(1, L)
    shift_l = jnp.tile(shift_c, rep).reshape(1, L)

    # ---- phase 2: lane-dense normalize ----------------------------------------------
    row_spec = pl.BlockSpec((tm, L), lambda t: (t, 0))
    vec_spec = pl.BlockSpec((1, L), lambda t: (0, 0))
    out_l = pl.pallas_call(
        _bn_normalize_kernel,
        out_shape=jax.ShapeDtypeStruct((rows, L), x.dtype),
        grid=(num_tiles,),
        in_specs=[row_spec, vec_spec, vec_spec],
        out_specs=row_spec,
        compiler_params=pltpu.CompilerParams(
            dimension_semantics=("parallel",),
            vmem_limit_bytes=vmem_limit),
    )(xl, scale_l, shift_l)

    out = out_l.reshape(orig_shape)                          # metadata-only reshape
    return out, new_rm, new_rv


def _reference(x, gamma, beta, running_mean, running_var,
               *, momentum=0.1, eps=1e-5, training=True):
    xf = x.astype(jnp.float32)
    axes = tuple(range(x.ndim - 1))
    mean = jnp.mean(xf, axis=axes)
    var = jnp.mean((xf - jnp.mean(xf, axis=axes, keepdims=True)) ** 2, axis=axes)
    new_rm, new_rv = running_mean, running_var
    if training and running_mean is not None:
        new_rm = (1 - momentum) * running_mean + momentum * mean
        new_rv = (1 - momentum) * running_var + momentum * var
        mean, var = new_rm, new_rv
    x_norm = (xf - mean) / jnp.sqrt(var + eps)
    return (x_norm * gamma + beta).astype(x.dtype), new_rm, new_rv


if __name__ == "__main__":
    root = jax.random.PRNGKey(0)
    k1, k2, k3, k4, k5 = jax.random.split(root, 5)

    # ---- main example: batch=2, seq=8, hidden(features)=32, channels-last, training --
    B, S, C = 2, 8, 32
    x = jax.random.normal(k1, (B, S, C), dtype=jnp.float32)
    gamma = jnp.ones((C,), jnp.float32)
    beta = jnp.zeros((C,), jnp.float32)
    rm = jnp.zeros((C,), jnp.float32)
    rv = jnp.ones((C,), jnp.float32)

    out, nrm, nrv = batchnorm_forward(x, gamma, beta, rm, rv,
                                      momentum=0.1, eps=1e-5, training=True)
    jax.block_until_ready((out, nrm, nrv))
    ref_out, ref_m, ref_v = _reference(x, gamma, beta, rm, rv,
                                       momentum=0.1, eps=1e-5, training=True)
    np.testing.assert_allclose(np.asarray(out), np.asarray(ref_out), rtol=1e-4, atol=1e-5)
    np.testing.assert_allclose(np.asarray(nrm), np.asarray(ref_m), rtol=1e-4, atol=1e-5)
    np.testing.assert_allclose(np.asarray(nrv), np.asarray(ref_v), rtol=1e-4, atol=1e-5)

    # ---- ragged multi-tile path: forces masking + dual-core reduce split -------------
    C2 = 128
    x2 = jax.random.normal(k2, (4, 540, C2), dtype=jnp.float32) * 1.5 + 0.3
    g2 = 1.0 + 0.1 * jax.random.normal(k3, (C2,), dtype=jnp.float32)
    b2 = 0.1 * jax.random.normal(k4, (C2,), dtype=jnp.float32)
    rm2 = jnp.zeros((C2,), jnp.float32)
    rv2 = jnp.ones((C2,), jnp.float32)
    out2, nrm2, nrv2 = batchnorm_forward(x2, g2, b2, rm2, rv2,
                                         momentum=0.1, eps=1e-5, training=True,
                                         block_bytes=64 << 10)
    jax.block_until_ready((out2, nrm2, nrv2))
    r_out2, r_m2, r_v2 = _reference(x2, g2, b2, rm2, rv2,
                                    momentum=0.1, eps=1e-5, training=True)
    np.testing.assert_allclose(np.asarray(out2), np.asarray(r_out2), rtol=1e-4, atol=1e-4)
    np.testing.assert_allclose(np.asarray(nrm2), np.asarray(r_m2), rtol=1e-4, atol=1e-4)
    np.testing.assert_allclose(np.asarray(nrv2), np.asarray(r_v2), rtol=1e-4, atol=1e-4)

    # ---- eval mode + awkward channel count (lane-sparse fallback) ---------------------
    C3 = 48
    x3 = jax.random.normal(k5, (3, 10, C3), dtype=jnp.float32)
    g3 = jnp.ones((C3,), jnp.float32)
    b3 = jnp.zeros((C3,), jnp.float32)
    rm3 = jnp.zeros((C3,), jnp.float32)
    rv3 = jnp.ones((C3,), jnp.float32)
    out3, _, _ = batchnorm_forward(x3, g3, b3, rm3, rv3,
                                   momentum=0.1, eps=1e-5, training=False)
    jax.block_until_ready(out3)
    r_out3, _, _ = _reference(x3, g3, b3, rm3, rv3,
                              momentum=0.1, eps=1e-5, training=False)
    np.testing.assert_allclose(np.asarray(out3), np.asarray(r_out3), rtol=1e-4, atol=1e-5)

    print("KERNEL_OK")
</pallas_src>

<mosaic_0001>
module attributes {stable_mosaic.version = 11 : i64} {
  func.func @_bn_reduce_kernel(%arg0: i32, %arg1: i32, %arg2: memref<4x128xf32, #tpu.memory_space<vmem>>, %arg3: memref<1x1x128xf32, #tpu.memory_space<vmem>>, %arg4: memref<1x1x128xf32, #tpu.memory_space<vmem>>) attributes {dimension_semantics = [#tpu.dimension_semantics<parallel>, #tpu.dimension_semantics<arbitrary>], iteration_bounds = array<i64: 1, 1>, scalar_prefetch = 0 : i64, scratch_operands = 0 : i64, tpu.core_type = #tpu.core_type<tc>, window_params = [{transform_indices = @transform_0, window_bounds = array<i64: 4, 128>}, {transform_indices = @transform_1, window_bounds = array<i64: 1, 1, 128>}, {transform_indices = @transform_2, window_bounds = array<i64: 1, 1, 128>}]} {
    %c0_i32 = arith.constant 0 : i32
    %0 = arith.cmpi eq, %arg1, %c0_i32 : i32
    %1 = arith.extui %0 : i1 to i32
    %c0_i32_0 = arith.constant 0 : i32
    %2 = arith.cmpi ne, %1, %c0_i32_0 : i32
    scf.if %2 {
      %cst_15 = arith.constant 0.000000e+00 : f32
      %17 = vector.broadcast %cst_15 : f32 to vector<1x1x128xf32>
      %c0_16 = arith.constant 0 : index
      %c0_17 = arith.constant 0 : index
      %c0_18 = arith.constant 0 : index
      %18 = vector.load %arg3[%c0_16, %c0_17, %c0_18] : memref<1x1x128xf32, #tpu.memory_space<vmem>>, vector<1x1x128xf32>
      tpu.vector_store %arg3[%c0_16, %c0_17, %c0_18], %17 {strides = array<i32>} : memref<1x1x128xf32, #tpu.memory_space<vmem>>, vector<1x1x128xf32>,
      %cst_19 = arith.constant 0.000000e+00 : f32
      %19 = vector.broadcast %cst_19 : f32 to vector<1x1x128xf32>
      %c0_20 = arith.constant 0 : index
      %c0_21 = arith.constant 0 : index
      %c0_22 = arith.constant 0 : index
      %20 = vector.load %arg4[%c0_20, %c0_21, %c0_22] : memref<1x1x128xf32, #tpu.memory_space<vmem>>, vector<1x1x128xf32>
      tpu.vector_store %arg4[%c0_20, %c0_21, %c0_22], %19 {strides = array<i32>} : memref<1x1x128xf32, #tpu.memory_space<vmem>>, vector<1x1x128xf32>,
    } else {
    }
    %c0 = arith.constant 0 : index
    %c0_1 = arith.constant 0 : index
    %3 = vector.load %arg2[%c0, %c0_1] : memref<4x128xf32, #tpu.memory_space<vmem>>, vector<4x128xf32>
    %cst = arith.constant dense<0.000000e+00> : vector<128xf32>
    %4 = vector.multi_reduction <add>, %3, %cst [0] : vector<4x128xf32> to vector<128xf32>
    %5 = vector.shape_cast %4 : vector<128xf32> to vector<1x128xf32>
    %6 = arith.mulf %3, %3 : vector<4x128xf32>
    %cst_2 = arith.constant dense<0.000000e+00> : vector<128xf32>
    %7 = vector.multi_reduction <add>, %6, %cst_2 [0] : vector<4x128xf32> to vector<128xf32>
    %8 = vector.shape_cast %7 : vector<128xf32> to vector<1x128xf32>
    %c0_3 = arith.constant 0 : index
    %c0_4 = arith.constant 0 : index
    %c0_5 = arith.constant 0 : index
    %9 = vector.load %arg3[%c0_3, %c0_4, %c0_5] : memref<1x1x128xf32, #tpu.memory_space<vmem>>, vector<1x1x128xf32>
    %10 = vector.shape_cast %5 : vector<1x128xf32> to vector<1x1x128xf32>
    %11 = arith.addf %9, %10 : vector<1x1x128xf32>
    %c0_6 = arith.constant 0 : index
    %c0_7 = arith.constant 0 : index
    %c0_8 = arith.constant 0 : index
    %12 = vector.load %arg3[%c0_6, %c0_7, %c0_8] : memref<1x1x128xf32, #tpu.memory_space<vmem>>, vector<1x1x128xf32>
    tpu.vector_store %arg3[%c0_6, %c0_7, %c0_8], %11 {strides = array<i32>} : memref<1x1x128xf32, #tpu.memory_space<vmem>>, vector<1x1x128xf32>,
    %c0_9 = arith.constant 0 : index
    %c0_10 = arith.constant 0 : index
    %c0_11 = arith.constant 0 : index
    %13 = vector.load %arg4[%c0_9, %c0_10, %c0_11] : memref<1x1x128xf32, #tpu.memory_space<vmem>>, vector<1x1x128xf32>
    %14 = vector.shape_cast %8 : vector<1x128xf32> to vector<1x1x128xf32>
    %15 = arith.addf %13, %14 : vector<1x1x128xf32>
    %c0_12 = arith.constant 0 : index
    %c0_13 = arith.constant 0 : index
    %c0_14 = arith.constant 0 : index
    %16 = vector.load %arg4[%c0_12, %c0_13, %c0_14] : memref<1x1x128xf32, #tpu.memory_space<vmem>>, vector<1x1x128xf32>
    tpu.vector_store %arg4[%c0_12, %c0_13, %c0_14], %15 {strides = array<i32>} : memref<1x1x128xf32, #tpu.memory_space<vmem>>, vector<1x1x128xf32>,
    return
  }
  func.func @transform_0(%arg0: i32, %arg1: i32) -> (i32, i32) {
    %c1_i32 = arith.constant 1 : i32
    %0 = arith.muli %arg0, %c1_i32 : i32
    %1 = arith.addi %0, %arg1 : i32
    %c0_i32 = arith.constant 0 : i32
    %2 = arith.minsi %1, %c0_i32 : i32
    %c0_i32_0 = arith.constant 0 : i32
    %c0_i32_1 = arith.constant 0 : i32
    return %2, %c0_i32_0 : i32, i32
  }
  func.func @transform_1(%arg0: i32, %arg1: i32) -> (i32, i32, i32) {
    %c0_i32 = arith.constant 0 : i32
    %c0_i32_0 = arith.constant 0 : i32
    %c0_i32_1 = arith.constant 0 : i32
    return %arg0, %c0_i32, %c0_i32_0 : i32, i32, i32
  }
  func.func @transform_2(%arg0: i32, %arg1: i32) -> (i32, i32, i32) {
    %c0_i32 = arith.constant 0 : i32
    %c0_i32_0 = arith.constant 0 : i32
    %c0_i32_1 = arith.constant 0 : i32
    return %arg0, %c0_i32, %c0_i32_0 : i32, i32, i32
  }
}

</mosaic_0001>

<llo_original>
// kernel: tpu_custom_call.1
$region0: #{tpu_custom_call.1}
  #allocation0 [shape = 'u32[]', space=smem, size = 0x4, offset = 0x4, fixed_abs, tag = 'smem constant byte address 0x4 - core index']
  #allocation1 [shape = 'u32[144,128]{1,0:T(1,128)}', space=vmem, size = 0x12000, scoped, tag = 'internal scratch']
  %s0 = inlined_call_operand.hbm [shape: f32[4,128], index: 0, kind: input, shape index: {}]
  %s1 = inlined_call_operand.hbm [shape: f32[1,1,128], index: 1, kind: output, shape index: {0}]
  %s2 = inlined_call_operand.hbm [shape: f32[1,1,128], index: 2, kind: output, shape index: {1}]
  %3 = xla_tuple %s1, %s2
  %s4 = sld [smem:[#allocation0]]
  $region30: #{tpu_custom_call.1} parent=0
    _
  %s6 = ssub.s32 1, %s4
  %s7 = scalar_select 0, %s6, %s4
  $region1: #{tpu_custom_call.1} parent=0
    #allocation2 [shape = 'u8[2048]{0}', space=vmem, size = 0x800, scoped, tag = 'input window, operand 0, single buffered']
    #allocation3 [shape = 's32[1]{0}', space=sflag, size = 0x4, scoped, tag = 'scoped memory for tpu_custom_call.1']
    #allocation4 [shape = 's32[1]{0}', space=sflag, size = 0x4, scoped, tag = 'scoped memory for tpu_custom_call.1']
    #allocation5 [shape = 'u8[512]{0}', space=vmem, size = 0x400, scoped, tag = 'output window, operand 0, single buffered']
    #allocation6 [shape = 'u8[512]{0}', space=vmem, size = 0x400, scoped, tag = 'output window, operand 1, single buffered']
    #allocation7 [shape = 's32[1]{0}', space=sflag, size = 0x4, scoped, tag = 'scoped memory for tpu_custom_call.1']
    %8 = vsyncpa [#allocation3], 0
    %9 = vsyncpa [#allocation4], 0
    %10 = vsyncpa [#allocation7], 0
    // Predicated region
    $region2: #{tpu_custom_call.1} parent=1 // pred_check
      _
    $region3: #{tpu_custom_call.1} parent=1 // pred_check_branch
      %12 = sbr.rel (0) target = $region5
    $region4: #{tpu_custom_call.1} parent=1 // pred_region
      %s13 = sadd.s32 0, 0
      %p14 = scmp.lt.s32.totalorder %s13, 0
      %s15 = scalar_select %p14, %s13, 0
      %s17 = ssub.s32 64, 64
      %18 = vsyncadd [#allocation3], %s17
      %s19 = smul.addr %s15, 64
      %s20 = scalar_lea.hbm %s0, %s19
      %s22 = sshll.u32 [#allocation2], 4
      %s23 = int_to_ptr.vmem [resolvable:$true] %s22
      %25 = dma.hbm_to_vmem [thread:$0]  %s20, 64, %s23, [#allocation3]
    $region5: #{tpu_custom_call.1} parent=1 // pred_fallthru
      _
    // Predicated region
    $region6: #{tpu_custom_call.1} parent=1 // pred_check
      _
    $region7: #{tpu_custom_call.1} parent=1 // pred_check_branch
      %27 = sbr.rel (0) target = $region9
    $region8: #{tpu_custom_call.1} parent=1 // pred_region
      %28 = dma.done [#allocation3], 64
    $region9: #{tpu_custom_call.1} parent=1 // pred_fallthru
      _
    %s29 = sadd.s32 0, 0
    %p30 = scmp.lt.s32.totalorder %s29, 0
    %s31 = scalar_select %p30, %s29, 0
    %p32 = scmp.eq.s32.totalorder 0, 0
    // Predicated region
    $region10: #{tpu_custom_call.1} parent=1 // pred_check
      %p33 = pneg %p32
    $region11: #{tpu_custom_call.1} parent=1 // pred_check_branch
      %35 = sbr.rel (%p33) target = $region13
    $region12: #{tpu_custom_call.1} parent=1 // pred_region
      %36 = vst [vmem:[#allocation5] sm:$0x1] 0.0
      %37 = vst [vmem:[#allocation6] sm:$0x1] 0.0
    $region13: #{tpu_custom_call.1} parent=1 // pred_fallthru
      _
    %v38 = vld [vmem:[#allocation2] sm:$0xf]
    %vm39 = vcmask 1043456
    %v40 = vsel %vm39, %v38, 0.0
    %v41 = vrot.slane %v40, 4
    %v42 = vadd.f32 %v40, %v41
    %v43 = vrot.slane %v42, 2
    %v44 = vadd.f32 %v42, %v43
    %v45 = vrot.slane %v44, 1
    %v46 = vadd.f32 %v44, %v45
    %v47 = vmul.f32 %v38, %v38
    %v48 = vsel %vm39, %v47, 0.0
    %v49 = vrot.slane %v48, 4
    %v50 = vadd.f32 %v48, %v49
    %v51 = vrot.slane %v50, 2
    %v52 = vadd.f32 %v50, %v51
    %v53 = vrot.slane %v52, 1
    %v54 = vadd.f32 %v52, %v53
    %v55 = vld [vmem:[#allocation5] sm:$0x1]
    %v56 = vadd.f32 %v55, %v46
    %57 = vst [vmem:[#allocation5] sm:$0x1] %v56
    %v58 = vld [vmem:[#allocation6] sm:$0x1]
    %v59 = vadd.f32 %v58, %v54
    %60 = vst [vmem:[#allocation6] sm:$0x1] %v59
    // Predicated region
    $region14: #{tpu_custom_call.1} parent=1 // pred_check
      _
    $region15: #{tpu_custom_call.1} parent=1 // pred_check_branch
      %62 = sbr.rel (0) target = $region17
    $region16: #{tpu_custom_call.1} parent=1 // pred_region
      %s64 = ssub.s32 16, 16
      %65 = vsyncadd [#allocation4], %s64
      %s67 = sshll.u32 [#allocation5], 4
      %s68 = int_to_ptr.vmem [resolvable:$true] %s67
      %70 = dma.vmem_to_hbm [thread:$0]  %s68, 16, %s1, [#allocation4]
    $region17: #{tpu_custom_call.1} parent=1 // pred_fallthru
      _
    // Predicated region
    $region18: #{tpu_custom_call.1} parent=1 // pred_check
      _
    $region19: #{tpu_custom_call.1} parent=1 // pred_check_branch
      %72 = sbr.rel (0) target = $region21
    $region20: #{tpu_custom_call.1} parent=1 // pred_region
      %s74 = ssub.s32 16, 16
      %75 = vsyncadd [#allocation7], %s74
      %s77 = sshll.u32 [#allocation6], 4
      %s78 = int_to_ptr.vmem [resolvable:$true] %s77
      %80 = dma.vmem_to_hbm [thread:$0]  %s78, 16, %s2, [#allocation7]
    $region21: #{tpu_custom_call.1} parent=1 // pred_fallthru
      _
    // Predicated region
    $region22: #{tpu_custom_call.1} parent=1 // pred_check
      _
    $region23: #{tpu_custom_call.1} parent=1 // pred_check_branch
      %82 = sbr.rel (0) target = $region25
    $region24: #{tpu_custom_call.1} parent=1 // pred_region
      %83 = dma.done [#allocation4], 16
    $region25: #{tpu_custom_call.1} parent=1 // pred_fallthru
      _
    // Predicated region
    $region26: #{tpu_custom_call.1} parent=1 // pred_check
      _
    $region27: #{tpu_custom_call.1} parent=1 // pred_check_branch
      %85 = sbr.rel (0) target = $region29
    $region28: #{tpu_custom_call.1} parent=1 // pred_region
      %86 = dma.done [#allocation7], 16
    $region29: #{tpu_custom_call.1} parent=1 // pred_fallthru
      _
    %87 = vsyncpa [#allocation3], 1
    %88 = vsyncpa [#allocation4], 1
    %89 = vsyncpa [#allocation7], 1

</llo_original>
